<compile_context>
chip_gen: v5e
topology: v5e:2x2
jax: 0.10.0
libtpu: 0.0.40
codegen_flags: <defaults>
</compile_context>

<pallas_src>
import jax
import jax.numpy as jnp
from jax.experimental import pallas as pl
from jax.experimental.pallas import tpu as pltpu


# ----------------------------- Pallas kernels --------------------------------
def _gcn_fused_kernel(a_ref, xc_ref, p_ref, o_ref):
    """Both GCN layers on an A_hat block resident in VMEM (read from HBM once).

    z   = relu((A @ x) * w1_row + b1_row) @ w2     (MXU matvec + rank-1 VPU + XLU)
    out = A @ z + b2                               (MXU matvec)
    """
    a = a_ref[...]                                                    # (N, N) bf16, resident
    ax = jnp.dot(a, xc_ref[...], preferred_element_type=jnp.float32)  # (N, 1) MXU, f32 acc
    w1 = p_ref[0:1, :]                                                # (1, P) zero past H
    b1 = p_ref[1:2, :]
    w2 = p_ref[2:3, :]
    b2 = p_ref[3:4, 0:1]
    # rank-1 feature expansion + bias + relu (VPU); padded lanes stay exactly 0
    h = jnp.maximum(ax * w1 + b1, 0.0)                                # (N, P)
    # h @ w2 (output width 1) as VPU multiply + XLU lane reduce
    z = jnp.sum(h * w2, axis=-1, keepdims=True)                       # (N, 1) f32
    az = jnp.dot(a, z.astype(a.dtype), preferred_element_type=jnp.float32)
    o_ref[...] = az + b2


def _gcn_layer1_stream_kernel(a_ref, xc_ref, p_ref, z_ref):
    """Row tile of z = relu((A @ x) * w1_row + b1_row) @ w2 (no f32 copy of A)."""
    ax = jnp.dot(a_ref[...], xc_ref[...],
                 preferred_element_type=jnp.float32)                  # (tm, 1) MXU
    w1 = p_ref[0:1, :]
    b1 = p_ref[1:2, :]
    w2 = p_ref[2:3, :]
    h = jnp.maximum(ax * w1 + b1, 0.0)                                # (tm, P)
    z_ref[...] = jnp.sum(h * w2, axis=-1, keepdims=True)              # (tm, 1)


def _gcn_layer2_stream_kernel(a_ref, zc_ref, p_ref, o_ref):
    """Row tile of out = A @ z + b2."""
    az = jnp.dot(a_ref[...], zc_ref[...],
                 preferred_element_type=jnp.float32)                  # (tm, 1) MXU
    o_ref[...] = az + p_ref[3:4, 0:1]


# ------------------------------ wrapper --------------------------------------
def _round_up(v, m):
    return ((v + m - 1) // m) * m


def _vmem_capacity_bytes():
    try:
        return int(pltpu.get_tpu_info().vmem_capacity_bytes)
    except Exception:
        return 64 * 1024 * 1024        # conservative (v7x-sized) fallback


def _pack_params(w1, b1, w2, b2, lane_pad):
    """Fold w1 (1,H), b1 (1,H), w2 (H,1), b2 (1,1) into one (8, lane_pad) tile."""
    h = w1.shape[1]
    p = jnp.zeros((8, lane_pad), jnp.float32)
    p = p.at[0, :h].set(w1.reshape(-1))
    p = p.at[1, :h].set(b1.reshape(-1))
    p = p.at[2, :h].set(w2.reshape(-1))
    p = p.at[3, 0].set(b2.reshape(-1)[0])
    return p


@jax.jit
def gcn_forward_pallas(a_hat_bf16, x, w1, b1, w2, b2):
    n = x.shape[0]
    hdim = w1.shape[1]
    lane_pad = _round_up(hdim, 128)
    params = _pack_params(w1, b1, w2, b2, lane_pad)
    xc = x.astype(jnp.bfloat16)                       # (N, 1) column for the MXU

    # ---- generation-aware VMEM plan (v7x: 64 MiB, v5e/v6e: 128 MiB) ----------
    vmem_cap = _vmem_capacity_bytes()
    vmem_limit = min(int(vmem_cap * 0.85), 100 * 1024 * 1024)
    a_bytes = 2 * n * n                               # bf16 A_hat
    resident_cost = (2 * a_bytes                      # A block (conservative 2x buffering)
                     + n * lane_pad * 4               # (N, P) hidden temporary
                     + 16 * n                         # vectors / output
                     + (2 << 20))                     # params + slack

    if resident_cost <= int(0.9 * vmem_limit):
        # ------- fused path: A_hat resident in VMEM, read from HBM exactly once -------
        cost = pl.CostEstimate(flops=4 * n * n, transcendentals=0,
                               bytes_accessed=2 * n * n + 16 * n)
        return pl.pallas_call(
            _gcn_fused_kernel,
            out_shape=jax.ShapeDtypeStruct((n, 1), jnp.float32),
            grid_spec=pltpu.PrefetchScalarGridSpec(
                num_scalar_prefetch=0,
                grid=(1,),
                in_specs=[
                    pl.BlockSpec((n, n), lambda i: (0, 0)),          # resident bf16 A_hat
                    pl.BlockSpec((n, 1), lambda i: (0, 0)),          # x column (bf16)
                    pl.BlockSpec((8, lane_pad), lambda i: (0, 0)),   # packed params
                ],
                out_specs=pl.BlockSpec((n, 1), lambda i: (0, 0)),
            ),
            compiler_params=pltpu.CompilerParams(
                dimension_semantics=("arbitrary",),
                vmem_limit_bytes=vmem_limit,
            ),
            cost_estimate=cost,
        )(a_hat_bf16, xc, params)

    # ------- streaming fallback: two auto-pipelined passes over A_hat row tiles -------
    # Tile as large as the VMEM budget allows, but always ~8+ tiles so the DMA
    # pipeline double-buffers and "parallel" shards tiles across v7x TensorCores.
    tm_vmem = max(128, (int(0.8 * vmem_limit) // (4 * n)) // 128 * 128)
    tm_target = max(128, _round_up(pl.cdiv(n, 8), 128))
    tm = min(tm_vmem, tm_target, 2048, _round_up(n, 128))
    grid = (pl.cdiv(n, tm),)
    cparams = pltpu.CompilerParams(
        dimension_semantics=("parallel",),
        vmem_limit_bytes=vmem_limit,
    )
    cost = pl.CostEstimate(flops=2 * n * n, transcendentals=0,
                           bytes_accessed=2 * n * n + 12 * n)

    def propagate(kernel, vec_col):
        return pl.pallas_call(
            kernel,
            out_shape=jax.ShapeDtypeStruct((n, 1), jnp.float32),
            grid_spec=pltpu.PrefetchScalarGridSpec(
                num_scalar_prefetch=0,
                grid=grid,
                in_specs=[
                    pl.BlockSpec((tm, n), lambda i: (i, 0)),         # bf16 A_hat row tile
                    pl.BlockSpec((n, 1), lambda i: (0, 0)),          # resident bf16 column
                    pl.BlockSpec((8, lane_pad), lambda i: (0, 0)),   # packed params
                ],
                out_specs=pl.BlockSpec((tm, 1), lambda i: (i, 0)),
            ),
            compiler_params=cparams,
            cost_estimate=cost,
        )(a_hat_bf16, vec_col, params)

    z = propagate(_gcn_layer1_stream_kernel, xc)                     # (N, 1) f32
    out = propagate(_gcn_layer2_stream_kernel, z.astype(jnp.bfloat16))
    return out


# ------------------------------ JAX glue --------------------------------------
def normalized_adjacency(edge_index, edge_weight, num_nodes):
    """Dense D^{-1/2} (A + I) D^{-1/2} matching PyG GCNConv defaults
    (add_self_loops=True, fill_value=1.0, flow='source_to_target')."""
    row, col = edge_index[0], edge_index[1]           # edges: row (source) -> col (target)
    loop = jnp.arange(num_nodes, dtype=edge_index.dtype)
    row = jnp.concatenate([row, loop])
    col = jnp.concatenate([col, loop])
    w = jnp.concatenate([edge_weight, jnp.ones((num_nodes,), edge_weight.dtype)])
    a = jnp.zeros((num_nodes, num_nodes), jnp.float32).at[col, row].add(w)
    deg = a.sum(axis=1)
    dinv = jnp.where(deg > 0, 1.0 / jnp.sqrt(deg), 0.0)
    return dinv[:, None] * a * dinv[None, :]


def glorot(key, shape):
    fan_in, fan_out = shape
    limit = jnp.sqrt(6.0 / (fan_in + fan_out))
    return jax.random.uniform(key, shape, jnp.float32, -limit, limit)


def gcn_forward_ref(a_hat, x, w1, b1, w2, b2, quantize_hidden=False):
    h = jnp.maximum(a_hat @ (x @ w1) + b1, 0.0)
    z = h @ w2
    if quantize_hidden:
        z = z.astype(jnp.bfloat16).astype(jnp.float32)
    return a_hat @ z + b2


# --------------------------------- main ---------------------------------------
if __name__ == "__main__":
    key = jax.random.PRNGKey(0)
    k_x, k_src, k_dst, k_w, k_w1, k_w2, k_b1, k_b2 = jax.random.split(key, 8)

    N = 16            # number of graph nodes
    E = 32            # number of directed edges
    H = 10            # hidden_layer_size (GCNModel default)

    # deterministic synthetic inputs
    x = jax.random.normal(k_x, (N, 1), jnp.float32)
    edge_index = jnp.stack(
        [jax.random.randint(k_src, (E,), 0, N),
         jax.random.randint(k_dst, (E,), 0, N)]
    ).astype(jnp.int32)                               # (2, E)
    edge_weight = jax.random.uniform(k_w, (E,), jnp.float32, 0.1, 1.0)

    # deterministic parameters (GCNConv: glorot weight; biases randomized here to
    # exercise the bias path — GCNConv itself initializes them to zero)
    w1 = glorot(k_w1, (1, H))                          # first_layer: GCNConv(1, H)
    b1 = 0.1 * jax.random.normal(k_b1, (1, H), jnp.float32)
    w2 = glorot(k_w2, (H, 1))                          # last_layer: GCNConv(H, 1)
    b2 = 0.1 * jax.random.normal(k_b2, (1, 1), jnp.float32)

    a_hat = normalized_adjacency(edge_index, edge_weight, N)
    # A_hat streamed / held in bf16 (halves HBM traffic and VMEM footprint);
    # kernels accumulate in f32. Intentional divergence from the f32 PyTorch ref.
    a_hat_bf16 = a_hat.astype(jnp.bfloat16)

    out = gcn_forward_pallas(a_hat_bf16, x, w1, b1, w2, b2)
    jax.block_until_ready(out)

    # reference with matching quantization (bf16 A_hat / x, bf16 hidden z) so
    # only kernel math / accumulation order differs
    a_deq = a_hat_bf16.astype(jnp.float32)
    x_deq = x.astype(jnp.bfloat16).astype(jnp.float32)
    ref = gcn_forward_ref(a_deq, x_deq, w1, b1, w2, b2, quantize_hidden=True)

    assert out.shape == (N, 1)
    assert jnp.allclose(out, ref, atol=1e-3, rtol=1e-3), "mismatch vs JAX reference"

    print("KERNEL_OK")
</pallas_src>

<mosaic_0001>
module attributes {stable_mosaic.version = 11 : i64} {
  func.func @_gcn_fused_kernel(%arg0: i32, %arg1: memref<16x16xbf16, #tpu.memory_space<vmem>>, %arg2: memref<16x1xbf16, #tpu.memory_space<vmem>>, %arg3: memref<8x128xf32, #tpu.memory_space<vmem>>, %arg4: memref<16x1xf32, #tpu.memory_space<vmem>>) attributes {dimension_semantics = [#tpu.dimension_semantics<arbitrary>], iteration_bounds = array<i64: 1>, scalar_prefetch = 0 : i64, scratch_operands = 0 : i64, tpu.core_type = #tpu.core_type<tc>, window_params = [{pipeline_mode = #tpu.pipeline_mode<synchronous>, transform_indices = @transform_0, window_bounds = array<i64: 16, 16>}, {pipeline_mode = #tpu.pipeline_mode<synchronous>, transform_indices = @transform_1, window_bounds = array<i64: 16, 1>}, {pipeline_mode = #tpu.pipeline_mode<synchronous>, transform_indices = @transform_2, window_bounds = array<i64: 8, 128>}, {pipeline_mode = #tpu.pipeline_mode<synchronous>, transform_indices = @transform_3, window_bounds = array<i64: 16, 1>}]} {
    %c0 = arith.constant 0 : index
    %c0_0 = arith.constant 0 : index
    %0 = vector.load %arg1[%c0, %c0_0] : memref<16x16xbf16, #tpu.memory_space<vmem>>, vector<16x16xbf16>
    %c0_1 = arith.constant 0 : index
    %c0_2 = arith.constant 0 : index
    %1 = vector.load %arg2[%c0_1, %c0_2] : memref<16x1xbf16, #tpu.memory_space<vmem>>, vector<16x1xbf16>
    %cst = arith.constant dense<0.000000e+00> : vector<16x1xf32>
    %2 = tpu.matmul %0, %1, %cst {dimension_numbers = #tpu.dot_dimension_numbers<[1], [0], [0], [1], [0, 0, 1, 1], [], []>} : vector<16x16xbf16>, vector<16x1xbf16>, vector<16x1xf32> -> vector<16x1xf32>
    %c0_3 = arith.constant 0 : index
    %c0_4 = arith.constant 0 : index
    %3 = vector.load %arg3[%c0_3, %c0_4] : memref<8x128xf32, #tpu.memory_space<vmem>>, vector<1x128xf32>
    %c1 = arith.constant 1 : index
    %c0_5 = arith.constant 0 : index
    %4 = vector.load %arg3[%c1, %c0_5] : memref<8x128xf32, #tpu.memory_space<vmem>>, vector<1x128xf32>
    %c2 = arith.constant 2 : index
    %c0_6 = arith.constant 0 : index
    %5 = vector.load %arg3[%c2, %c0_6] : memref<8x128xf32, #tpu.memory_space<vmem>>, vector<1x128xf32>
    %c3 = arith.constant 3 : index
    %c0_7 = arith.constant 0 : index
    %6 = vector.load %arg3[%c3, %c0_7] : memref<8x128xf32, #tpu.memory_space<vmem>>, vector<1x1xf32>
    %7 = vector.broadcast %2 : vector<16x1xf32> to vector<16x128xf32>
    %8 = vector.broadcast %3 : vector<1x128xf32> to vector<16x128xf32>
    %9 = arith.mulf %7, %8 : vector<16x128xf32>
    %10 = vector.broadcast %4 : vector<1x128xf32> to vector<16x128xf32>
    %11 = arith.addf %9, %10 : vector<16x128xf32>
    %cst_8 = arith.constant 0.000000e+00 : f32
    %12 = vector.broadcast %cst_8 : f32 to vector<16x128xf32>
    %13 = arith.maximumf %11, %12 : vector<16x128xf32>
    %14 = vector.broadcast %5 : vector<1x128xf32> to vector<16x128xf32>
    %15 = arith.mulf %13, %14 : vector<16x128xf32>
    %cst_9 = arith.constant dense<0.000000e+00> : vector<16xf32>
    %16 = vector.multi_reduction <add>, %15, %cst_9 [1] : vector<16x128xf32> to vector<16xf32>
    %17 = vector.shape_cast %16 : vector<16xf32> to vector<16x1xf32>
    %18 = arith.truncf %17 : vector<16x1xf32> to vector<16x1xbf16>
    %cst_10 = arith.constant dense<0.000000e+00> : vector<16x1xf32>
    %19 = tpu.matmul %0, %18, %cst_10 {dimension_numbers = #tpu.dot_dimension_numbers<[1], [0], [0], [1], [0, 0, 1, 1], [], []>} : vector<16x16xbf16>, vector<16x1xbf16>, vector<16x1xf32> -> vector<16x1xf32>
    %20 = vector.broadcast %6 : vector<1x1xf32> to vector<16x1xf32>
    %21 = arith.addf %19, %20 : vector<16x1xf32>
    %c0_11 = arith.constant 0 : index
    %c0_12 = arith.constant 0 : index
    %22 = vector.load %arg4[%c0_11, %c0_12] : memref<16x1xf32, #tpu.memory_space<vmem>>, vector<16x1xf32>
    tpu.vector_store %arg4[%c0_11, %c0_12], %21 {strides = array<i32>} : memref<16x1xf32, #tpu.memory_space<vmem>>, vector<16x1xf32>,
    return
  }
  func.func @transform_0(%arg0: i32) -> (i32, i32) {
    %c0_i32 = arith.constant 0 : i32
    %c0_i32_0 = arith.constant 0 : i32
    %c0_i32_1 = arith.constant 0 : i32
    return %c0_i32, %c0_i32_0 : i32, i32
  }
  func.func @transform_1(%arg0: i32) -> (i32, i32) {
    %c0_i32 = arith.constant 0 : i32
    %c0_i32_0 = arith.constant 0 : i32
    %c0_i32_1 = arith.constant 0 : i32
    return %c0_i32, %c0_i32_0 : i32, i32
  }
  func.func @transform_2(%arg0: i32) -> (i32, i32) {
    %c0_i32 = arith.constant 0 : i32
    %c0_i32_0 = arith.constant 0 : i32
    %c0_i32_1 = arith.constant 0 : i32
    return %c0_i32, %c0_i32_0 : i32, i32
  }
  func.func @transform_3(%arg0: i32) -> (i32, i32) {
    %c0_i32 = arith.constant 0 : i32
    %c0_i32_0 = arith.constant 0 : i32
    %c0_i32_1 = arith.constant 0 : i32
    return %c0_i32, %c0_i32_0 : i32, i32
  }
}

</mosaic_0001>

<llo_original>
// kernel: gcn_forward_pallas.1
$region0: #{gcn_forward_pallas.1}
  #allocation0 [shape = 'u32[]', space=smem, size = 0x4, offset = 0x4, fixed_abs, tag = 'smem constant byte address 0x4 - core index']
  #allocation1 [shape = 'u32[72,128]{1,0:T(1,128)}', space=vmem, size = 0x9000, scoped, tag = 'internal scratch']
  %s0 = inlined_call_operand.vmem [shape: bf16[16,16], index: 0, kind: input, shape index: {}]
  %s1 = inlined_call_operand.vmem [shape: bf16[16,1], index: 1, kind: input, shape index: {}]
  %s2 = inlined_call_operand.vmem [shape: f32[8,128], index: 2, kind: input, shape index: {}]
  %s3 = inlined_call_operand.vmem [shape: f32[16,1], index: 3, kind: output, shape index: {}]
  %s4 = sld [smem:[#allocation0]]
  $region22: #{gcn_forward_pallas.1} parent=0
    _
  %s6 = ssub.s32 1, %s4
  %s7 = scalar_select 0, %s6, %s4
  // Predicated region
  $region2: #{gcn_forward_pallas.1} parent=0 // pred_check
    _
  $region3: #{gcn_forward_pallas.1} parent=0 // pred_check_branch
    %9 = sbr.rel (0) target = $region5
  $region4: #{gcn_forward_pallas.1} parent=0 // pred_region
    _
  $region5: #{gcn_forward_pallas.1} parent=0 // pred_fallthru
    _
  // Predicated region
  $region6: #{gcn_forward_pallas.1} parent=0 // pred_check
    _
  $region7: #{gcn_forward_pallas.1} parent=0 // pred_check_branch
    %11 = sbr.rel (0) target = $region9
  $region8: #{gcn_forward_pallas.1} parent=0 // pred_region
    _
  $region9: #{gcn_forward_pallas.1} parent=0 // pred_fallthru
    _
  // Predicated region
  $region10: #{gcn_forward_pallas.1} parent=0 // pred_check
    _
  $region11: #{gcn_forward_pallas.1} parent=0 // pred_check_branch
    %13 = sbr.rel (0) target = $region13
  $region12: #{gcn_forward_pallas.1} parent=0 // pred_region
    _
  $region13: #{gcn_forward_pallas.1} parent=0 // pred_fallthru
    _
  %v15 = vld [vmem:[%s0] sm:$0xf]
  %v16 = vld [vmem:[%s0 + $0x4] sm:$0xf]
  %v17 = vld [vmem:[%s1] sm:$0xf]
  %v18 = vld [vmem:[%s1 + $0x4] sm:$0xf]
  %v21 = vunpack.c.l.b16 %v15
  %v22 = vunpack.c.l.b16 %v16
  %v23 = vpack.c.b16 %v22, %v21
  %v26 = vunpack.c.l.b16 %v17
  %v27 = vunpack.c.l.b16 %v18
  %v28 = vpack.c.b16 %v27, %v26
  %vm30 = vcmask 130048
  %v32 = vsel %vm30, %v23, 0
  %34 = vmatpush.bf16.msra.mxu0 0
  %35 = vmatpush.bf16.msra.mxu0 0
  %36 = vmatpush.bf16.msra.mxu0 0
  %37 = vmatpush.bf16.msra.mxu0 0
  %38 = vmatpush.bf16.msra.mxu0 0
  %39 = vmatpush.bf16.msra.mxu0 0
  %40 = vmatpush.bf16.msra.mxu0 0
  %41 = vmatpush.bf16.msra.mxu0 %v28
  %42 = vmatmul.bf16.gmra.mxu0 %v32
  %v43 = vpop.f32.mrf.mxu0
  %v44 = vadd.f32 0.0, %v43
  %v45 = vpop.f32.mrf.mxu0
  %v46 = vadd.f32 0.0, %v45
  %47 = vdwg.mxu0
  %v48 = vld [vmem:[%s2] sm:$0x1]
  %v49 = vld [vmem:[%s2 + $0x1] sm:$0x1]
  %v50 = vld [vmem:[%s2 + $0x2] sm:$0x1]
  %v51 = vld [vmem:[%s2 + $0x3] sm:$0x1]
  %53 = vset.pattern.permute.xlu0 0
  %54 = vperm.xlu0 %53, %v44
  %v55 = vpop.permute.xlu0 %54
  %58 = vset.pattern.permute.xlu0 0
  %59 = vperm.xlu0 %58, %v46
  %v60 = vpop.permute.xlu0 %59
  %v62 = vperm.slane %v48, 0
  %v63 = vmul.f32 %v55, %v62
  %v64 = vmul.f32 %v60, %v62
  %v65 = vperm.slane %v49, 0
  %v66 = vadd.f32 %v63, %v65
  %v67 = vadd.f32 %v64, %v65
  %v68 = vmax.f32 %v66, 0.0
  %v69 = vmax.f32 %v67, 0.0
  %v70 = vperm.slane %v50, 0
  %v71 = vmul.f32 %v68, %v70
  %v72 = vmul.f32 %v69, %v70
  %73 = vadd.xlane.f32.xlu0 %v71
  %v74 = vpop.xlane.xlu0 %73
  %75 = vadd.xlane.f32.xlu0 %v72
  %v76 = vpop.xlane.xlu0 %75
  %v77 = vpack.c.bf16 %v76, %v74
  %v78 = vperm.slane %v51, 0
  %79 = vmatpush.bf16.msra.mxu0 0
  %80 = vmatpush.bf16.msra.mxu0 0
  %81 = vmatpush.bf16.msra.mxu0 0
  %82 = vmatpush.bf16.msra.mxu0 0
  %83 = vmatpush.bf16.msra.mxu0 0
  %84 = vmatpush.bf16.msra.mxu0 0
  %85 = vmatpush.bf16.msra.mxu0 0
  %86 = vmatpush.bf16.msra.mxu0 %v77
  %87 = vmatmul.bf16.gmra.mxu0 %v32
  %v88 = vpop.f32.mrf.mxu0
  %v89 = vadd.f32 %v78, %v88
  %v90 = vpop.f32.mrf.mxu0
  %v91 = vadd.f32 %v78, %v90
  %92 = vdwg.mxu0
  %vm93 = vcmask 7168
  %94 = vst.msk [vmem:[%s3] sm:$0xff] %vm93, %v89
  %95 = vst.msk [vmem:[%s3 + $0x8] sm:$0xff] %vm93, %v91
  // Predicated region
  $region14: #{gcn_forward_pallas.1} parent=0 // pred_check
    _
  $region15: #{gcn_forward_pallas.1} parent=0 // pred_check_branch
    %97 = sbr.rel (0) target = $region17
  $region16: #{gcn_forward_pallas.1} parent=0 // pred_region
    _
  $region17: #{gcn_forward_pallas.1} parent=0 // pred_fallthru
    _
  // Predicated region
  $region18: #{gcn_forward_pallas.1} parent=0 // pred_check
    _
  $region19: #{gcn_forward_pallas.1} parent=0 // pred_check_branch
    %99 = sbr.rel (0) target = $region21
  $region20: #{gcn_forward_pallas.1} parent=0 // pred_region
    _
  $region21: #{gcn_forward_pallas.1} parent=0 // pred_fallthru
    _

</llo_original>
